<compile_context>
chip_gen: v5e
topology: v5e:2x2
jax: 0.10.0
libtpu: 0.0.40
codegen_flags: <defaults>
</compile_context>

<pallas_src>
import functools

import jax
import jax.numpy as jnp
from jax import lax
from jax.experimental import pallas as pl
from jax.experimental.pallas import tpu as pltpu


def _fixpoint_kernel(x_ref, wt_ref, o_ref, *, tol, max_iter, unroll, matmul_dtype):
    """One batch tile resident in VMEM; iterate the fixed-point map in-kernel."""
    if max_iter <= 0:                        # static guard: reference returns zeros
        o_ref[...] = jnp.zeros_like(o_ref)
        return

    x = x_ref[...].astype(jnp.float32)       # (tB, F)
    wt = wt_ref[...].astype(matmul_dtype)    # (F, F) == W^T, VMEM-resident
    tol2 = jnp.float32(tol) * jnp.float32(tol)

    def step(z):
        # z stays f32; only the MXU operand is cast (f32 accumulation).
        return jnp.tanh(
            jnp.dot(z.astype(matmul_dtype), wt,
                    preferred_element_type=jnp.float32) + x)

    # Iteration 1 for free: z0 == 0  =>  tanh(z0 @ W^T + x) == tanh(x).
    z = jnp.tanh(x)
    err2 = jnp.sum(z * z)                    # ||z1 - z0||_F^2

    n_blocks, rem = divmod(max_iter - 1, unroll)

    if n_blocks > 0:
        def cond(carry):
            blk, e2, _ = carry
            return jnp.logical_and(blk < n_blocks, e2 >= tol2)

        def body(carry):
            blk, _, zc = carry
            # `unroll` unconditional fixed-point steps.  Convergence is checked
            # once per block (deferred): one cross-lane reduce + one scalar
            # branch per `unroll` steps, no tile-wide selects in the hot loop.
            for _ in range(unroll - 1):
                zc = step(zc)
            zn = step(zc)
            d = zn - zc
            return blk + 1, jnp.sum(d * d), zn

        _, err2, z = lax.while_loop(cond, body, (jnp.int32(0), err2, z))

    # Remaining (< unroll) iterations so the total never exceeds max_iter.
    # Masked, so they are no-ops if we already converged (runs once, cheap).
    for _ in range(rem):
        active = err2 >= tol2
        zn = step(z)
        d = zn - z
        z = jnp.where(active, zn, z)
        err2 = jnp.where(active, jnp.sum(d * d), err2)

    o_ref[...] = z.astype(o_ref.dtype)


def _vmem_budget_bytes():
    """Half of the per-core VMEM capacity (~32 MiB v7x, 64 MiB v5e/v6e)."""
    try:
        cap = int(pltpu.get_tpu_info().vmem_capacity_bytes)
    except Exception:
        cap = 128 * 1024 * 1024
    return max(min(cap // 2, 96 * 1024 * 1024), 16 * 1024 * 1024)


def _choose_block_b(B, F, w_itemsize, budget):
    """Largest multiple-of-8 divisor of B fitting `budget`; prefer >= 2 tiles."""
    per_row = 9 * F * 4                   # x/out pipeline buffers + f32 z temporaries
    fixed = 2 * F * F * w_itemsize        # resident W^T (worst case: 2 buffers)
    cap_rows = max((budget - fixed) // per_row, 8)
    candidates = [b for b in range(8, B + 1, 8) if B % b == 0]
    if not candidates:
        return B                           # tiny / odd batch: one full tile
    fitting = [b for b in candidates if b <= cap_rows] or [candidates[0]]
    block = max(fitting)
    if block == B and B >= 16:
        # Keep >= 2 batch tiles: both v7x TensorCores get work and the x/out
        # double-buffering can overlap HBM traffic with the iteration loop.
        smaller = [b for b in candidates if b < B]
        if smaller:
            block = max(smaller)
    return block


def fixpoint_layer(x, wt, *, tol=1e-4, max_iter=50, block_b=None, unroll=2,
                   matmul_dtype=jnp.bfloat16, pad_features=True):
    """Fixed-point layer forward.

    x:  (B, F) activations.
    wt: (F, F) == W^T, pre-transposed ONCE at parameter-init time.  For best
        performance also store it in `matmul_dtype` (bf16) in HBM.

    Documented deviations from the PyTorch reference:
      * convergence is tested on the squared Frobenius norm (same decisions);
      * the check runs once every `unroll` iterations: up to `unroll-1` extra
        iterations past the reference stop point (never past max_iter);
        unroll=1 restores exact per-step stopping;
      * when the batch is split into more than one tile the norm is per tile,
        not global;
      * with bf16 operands the residual can plateau above tol=1e-4 (bf16
        rounding floor) so the loop then runs the full max_iter.
    """
    B, F = x.shape
    assert wt.shape == (F, F)
    assert unroll >= 1
    assert max_iter >= 0

    # One-time weight cast (ideally the caller already stores wt in this dtype).
    if wt.dtype != jnp.dtype(matmul_dtype):
        wt = wt.astype(matmul_dtype)

    # Pad features to a multiple of 128: lane-dense stores + full MXU width.
    # Zero-padded columns are exact fixed points (stay 0) and add 0 to the norm.
    F_pad = F
    if pad_features and F % 128 != 0:
        F_pad = ((F + 127) // 128) * 128
        x = jnp.pad(x, ((0, 0), (0, F_pad - F)))
        wt = jnp.pad(wt, ((0, F_pad - F), (0, F_pad - F)))

    w_item = jnp.dtype(wt.dtype).itemsize
    x_item = jnp.dtype(x.dtype).itemsize
    budget = _vmem_budget_bytes()

    if block_b is None:
        block_b = _choose_block_b(B, F_pad, w_item, budget)
    assert B % block_b == 0, "block_b must divide the batch size"
    assert block_b % 8 == 0 or block_b == B, "block_b must be a multiple of 8"
    nb = B // block_b

    need = (4 * block_b * F_pad * x_item          # x + out tiles, double-buffered
            + 2 * F_pad * F_pad * w_item          # W^T (worst case: 2 buffers)
            + 4 * block_b * F_pad * 4             # z / z_next / diff f32 temporaries
            + block_b * F_pad * jnp.dtype(matmul_dtype).itemsize)  # z matmul cast
    vmem_limit = int(min(max(2 * need, 16 * 1024 * 1024), budget))

    kernel = functools.partial(
        _fixpoint_kernel, tol=tol, max_iter=max_iter,
        unroll=unroll, matmul_dtype=matmul_dtype)

    def run(single_buffer_w):
        if single_buffer_w:
            # W^T never changes across grid steps; one pipeline buffer halves
            # its VMEM footprint (matters for large F on v7x's 64 MiB VMEM).
            wt_spec = pl.BlockSpec((F_pad, F_pad), lambda i: (0, 0),
                                   pipeline_mode=pl.Buffered(1))
        else:
            wt_spec = pl.BlockSpec((F_pad, F_pad), lambda i: (0, 0))
        return pl.pallas_call(
            kernel,
            out_shape=jax.ShapeDtypeStruct((B, F_pad), x.dtype),
            grid=(nb,),
            in_specs=[pl.BlockSpec((block_b, F_pad), lambda i: (i, 0)),  # x tiles
                      wt_spec],                                          # resident W^T
            out_specs=pl.BlockSpec((block_b, F_pad), lambda i: (i, 0)),
            compiler_params=pltpu.CompilerParams(
                dimension_semantics=("parallel",),    # megacore over batch tiles
                vmem_limit_bytes=vmem_limit),
        )(x, wt)

    try:
        out = run(single_buffer_w=True)
    except Exception:
        # This JAX/Mosaic build rejected pipeline_mode=pl.Buffered(1) for the
        # grid-invariant weight; fall back to the default double-buffered spec.
        out = run(single_buffer_w=False)

    return out[:, :F] if F_pad != F else out


def fixpoint_reference(x, w, *, tol=1e-4, max_iter=50):
    """Pure-JAX reference matching the PyTorch forward (w is (out, in))."""
    z = jnp.zeros_like(x)
    it = 0
    while it < max_iter:
        z_next = jnp.tanh(
            jnp.dot(z, w.T, precision=lax.Precision.HIGHEST) + x)
        err = jnp.sqrt(jnp.sum((z_next - z) ** 2))
        z = z_next
        it += 1
        if float(err) < tol:
            break
    return z


if __name__ == "__main__":
    B, F = 8, 32  # batch, out_features

    key = jax.random.PRNGKey(0)
    kx, kw = jax.random.split(key)
    x = jax.random.normal(kx, (B, F), dtype=jnp.float32)
    # nn.Linear default init: U(-1/sqrt(F), 1/sqrt(F)).
    bound = 1.0 / jnp.sqrt(jnp.float32(F))
    w = jax.random.uniform(kw, (F, F), dtype=jnp.float32,
                           minval=-bound, maxval=bound)

    # Parameter init: transpose ONCE; keep a bf16 copy in HBM for the fast path.
    wt_f32 = jnp.asarray(w.T)
    wt_bf16 = wt_f32.astype(jnp.bfloat16)

    # (1) Reference-exact configuration: f32 MXU operands, per-step convergence
    #     check (unroll=1).  Matches the PyTorch forward to f32 accuracy.
    out_exact = fixpoint_layer(x, wt_f32, tol=1e-4, max_iter=50,
                               matmul_dtype=jnp.float32, unroll=1)
    out_exact = jax.block_until_ready(out_exact)
    ref = fixpoint_reference(x, w, tol=1e-4, max_iter=50)
    assert out_exact.shape == (B, F)
    assert jnp.allclose(out_exact, ref, atol=1e-5, rtol=1e-5), \
        "f32 kernel mismatch vs reference"

    # (2) Performance default: bf16 weights/operands (f32 accumulation),
    #     convergence checked once per `unroll` steps.  Sanity-checked against
    #     a reference run with bf16-rounded weights (loose bound accounts for
    #     the per-step bf16 rounding of the z matmul operand).
    out_fast = fixpoint_layer(x, wt_bf16, tol=1e-4, max_iter=50)
    out_fast = jax.block_until_ready(out_fast)
    ref_bf16 = fixpoint_reference(
        x, w.astype(jnp.bfloat16).astype(jnp.float32), tol=1e-4, max_iter=50)
    assert out_fast.shape == (B, F)
    assert jnp.allclose(out_fast, ref_bf16, atol=1e-1), \
        "bf16 fast path sanity check failed"

    print("KERNEL_OK")
</pallas_src>

<mosaic_0001>
module attributes {stable_mosaic.version = 11 : i64} {
  func.func @_fixpoint_kernel(%arg0: i32, %arg1: memref<8x128xf32, #tpu.memory_space<vmem>>, %arg2: memref<128x128xf32, #tpu.memory_space<vmem>>, %arg3: memref<8x128xf32, #tpu.memory_space<vmem>>) attributes {dimension_semantics = [#tpu.dimension_semantics<parallel>], iteration_bounds = array<i64: 1>, scalar_prefetch = 0 : i64, scratch_operands = 0 : i64, tpu.core_type = #tpu.core_type<tc>, window_params = [{transform_indices = @transform_0, window_bounds = array<i64: 8, 128>}, {pipeline_mode = #tpu.pipeline_mode<synchronous>, transform_indices = @transform_1, window_bounds = array<i64: 128, 128>}, {transform_indices = @transform_2, window_bounds = array<i64: 8, 128>}]} {
    %c0 = arith.constant 0 : index
    %c0_0 = arith.constant 0 : index
    %0 = vector.load %arg1[%c0, %c0_0] : memref<8x128xf32, #tpu.memory_space<vmem>>, vector<8x128xf32>
    %c0_1 = arith.constant 0 : index
    %c0_2 = arith.constant 0 : index
    %1 = vector.load %arg2[%c0_1, %c0_2] : memref<128x128xf32, #tpu.memory_space<vmem>>, vector<128x128xf32>
    %cst = arith.constant 9.99999974E-5 : f32
    %cst_3 = arith.constant 9.99999974E-5 : f32
    %2 = arith.mulf %cst, %cst_3 : f32
    %3 = math.tanh %0 : vector<8x128xf32>
    %4 = arith.mulf %3, %3 : vector<8x128xf32>
    %5 = vector.shape_cast %4 : vector<8x128xf32> to vector<1x8x128xf32>
    %cst_4 = arith.constant dense<0.000000e+00> : vector<1xf32>
    %6 = vector.multi_reduction <add>, %5, %cst_4 [1, 2] : vector<1x8x128xf32> to vector<1xf32>
    %7 = vector.shape_cast %6 : vector<1xf32> to vector<1x1x1xf32>
    %8 = vector.extract %7[0, 0, 0] : f32 from vector<1x1x1xf32>
    %c0_i32 = arith.constant 0 : i32
    %9:3 = scf.while (%arg4 = %c0_i32, %arg5 = %8, %arg6 = %3) : (i32, f32, vector<8x128xf32>) -> (i32, f32, vector<8x128xf32>) {
      %c49_i32 = arith.constant 49 : i32
      %11 = arith.cmpi slt, %arg4, %c49_i32 : i32
      %12 = arith.cmpf oge, %arg5, %2 : f32
      %13 = arith.andi %11, %12 : i1
      scf.condition(%13) %arg4, %arg5, %arg6 : i32, f32, vector<8x128xf32>
    } do {
    ^bb0(%arg4: i32, %arg5: f32, %arg6: vector<8x128xf32>):
      %cst_7 = arith.constant dense<0.000000e+00> : vector<8x128xf32>
      %11 = tpu.matmul %arg6, %1, %cst_7 {dimension_numbers = #tpu.dot_dimension_numbers<[1], [0], [0], [1], [0, 0, 1, 1], [], []>} : vector<8x128xf32>, vector<128x128xf32>, vector<8x128xf32> -> vector<8x128xf32>
      %12 = arith.addf %11, %0 : vector<8x128xf32>
      %13 = math.tanh %12 : vector<8x128xf32>
      %14 = arith.subf %13, %arg6 : vector<8x128xf32>
      %c1_i32 = arith.constant 1 : i32
      %15 = arith.addi %arg4, %c1_i32 : i32
      %16 = arith.mulf %14, %14 : vector<8x128xf32>
      %17 = vector.shape_cast %16 : vector<8x128xf32> to vector<1x8x128xf32>
      %cst_8 = arith.constant dense<0.000000e+00> : vector<1xf32>
      %18 = vector.multi_reduction <add>, %17, %cst_8 [1, 2] : vector<1x8x128xf32> to vector<1xf32>
      %19 = vector.shape_cast %18 : vector<1xf32> to vector<1x1x1xf32>
      %20 = vector.extract %19[0, 0, 0] : f32 from vector<1x1x1xf32>
      scf.yield %15, %20, %13 : i32, f32, vector<8x128xf32>
    }
    %c0_5 = arith.constant 0 : index
    %c0_6 = arith.constant 0 : index
    %10 = vector.load %arg3[%c0_5, %c0_6] : memref<8x128xf32, #tpu.memory_space<vmem>>, vector<8x128xf32>
    tpu.vector_store %arg3[%c0_5, %c0_6], %9#2 {strides = array<i32>} : memref<8x128xf32, #tpu.memory_space<vmem>>, vector<8x128xf32>,
    return
  }
  func.func @transform_0(%arg0: i32) -> (i32, i32) {
    %c0_i32 = arith.constant 0 : i32
    %c0_i32_0 = arith.constant 0 : i32
    return %arg0, %c0_i32 : i32, i32
  }
  func.func @transform_1(%arg0: i32) -> (i32, i32) {
    %c0_i32 = arith.constant 0 : i32
    %c0_i32_0 = arith.constant 0 : i32
    %c0_i32_1 = arith.constant 0 : i32
    return %c0_i32, %c0_i32_0 : i32, i32
  }
  func.func @transform_2(%arg0: i32) -> (i32, i32) {
    %c0_i32 = arith.constant 0 : i32
    %c0_i32_0 = arith.constant 0 : i32
    return %arg0, %c0_i32 : i32, i32
  }
}

module attributes {stable_mosaic.version = 11 : i64} {
  func.func @_fixpoint_kernel(%arg0: i32, %arg1: memref<8x128xf32, #tpu.memory_space<vmem>>, %arg2: memref<128x128xf32, #tpu.memory_space<vmem>>, %arg3: memref<8x128xf32, #tpu.memory_space<vmem>>) attributes {dimension_semantics = [#tpu.dimension_semantics<parallel>], iteration_bounds = array<i64: 1>, scalar_prefetch = 0 : i64, scratch_operands = 0 : i64, tpu.core_type = #tpu.core_type<tc>, window_params = [{transform_indices = @transform_0, window_bounds = array<i64: 8, 128>}, {pipeline_mode = #tpu.pipeline_mode<synchronous>, transform_indices = @transform_1, window_bounds = array<i64: 128, 128>}, {transform_indices = @transform_2, window_bounds = array<i64: 8, 128>}]} {
    %c0 = arith.constant 0 : index
    %c0_0 = arith.constant 0 : index
    %0 = vector.load %arg1[%c0, %c0_0] : memref<8x128xf32, #tpu.memory_space<vmem>>, vector<8x128xf32>
    %c0_1 = arith.constant 0 : index
    %c0_2 = arith.constant 0 : index
    %1 = vector.load %arg2[%c0_1, %c0_2] : memref<128x128xf32, #tpu.memory_space<vmem>>, vector<128x128xf32>
    %cst = arith.constant 9.99999974E-5 : f32
    %cst_3 = arith.constant 9.99999974E-5 : f32
    %2 = arith.mulf %cst, %cst_3 : f32
    %3 = math.tanh %0 : vector<8x128xf32>
    %4 = arith.mulf %3, %3 : vector<8x128xf32>
    %5 = vector.shape_cast %4 : vector<8x128xf32> to vector<1x8x128xf32>
    %cst_4 = arith.constant dense<0.000000e+00> : vector<1xf32>
    %6 = vector.multi_reduction <add>, %5, %cst_4 [1, 2] : vector<1x8x128xf32> to vector<1xf32>
    %7 = vector.shape_cast %6 : vector<1xf32> to vector<1x1x1xf32>
    %8 = vector.extract %7[0, 0, 0] : f32 from vector<1x1x1xf32>
    %c0_i32 = arith.constant 0 : i32
    %9:3 = scf.while (%arg4 = %c0_i32, %arg5 = %8, %arg6 = %3) : (i32, f32, vector<8x128xf32>) -> (i32, f32, vector<8x128xf32>) {
      %c49_i32 = arith.constant 49 : i32
      %11 = arith.cmpi slt, %arg4, %c49_i32 : i32
      %12 = arith.cmpf oge, %arg5, %2 : f32
      %13 = arith.andi %11, %12 : i1
      scf.condition(%13) %arg4, %arg5, %arg6 : i32, f32, vector<8x128xf32>
    } do {
    ^bb0(%arg4: i32, %arg5: f32, %arg6: vector<8x128xf32>):
      %cst_7 = arith.constant dense<0.000000e+00> : vector<8x128xf32>
      %11 = tpu.matmul %arg6, %1, %cst_7 {dimension_numbers = #tpu.dot_dimension_numbers<[1], [0], [0], [1], [0, 0, 1, 1], [], []>} : vector<8x128xf32>, vector<128x128xf32>, vector<8x128xf32> -> vector<8x128xf32>
      %12 = arith.addf %11, %0 : vector<8x128xf32>
      %13 = math.tanh %12 : vector<8x128xf32>
      %14 = arith.subf %13, %arg6 : vector<8x128xf32>
      %c1_i32 = arith.constant 1 : i32
      %15 = arith.addi %arg4, %c1_i32 : i32
      %16 = arith.mulf %14, %14 : vector<8x128xf32>
      %17 = vector.shape_cast %16 : vector<8x128xf32> to vector<1x8x128xf32>
      %cst_8 = arith.constant dense<0.000000e+00> : vector<1xf32>
      %18 = vector.multi_reduction <add>, %17, %cst_8 [1, 2] : vector<1x8x128xf32> to vector<1xf32>
      %19 = vector.shape_cast %18 : vector<1xf32> to vector<1x1x1xf32>
      %20 = vector.extract %19[0, 0, 0] : f32 from vector<1x1x1xf32>
      scf.yield %15, %20, %13 : i32, f32, vector<8x128xf32>
    }
    %c0_5 = arith.constant 0 : index
    %c0_6 = arith.constant 0 : index
    %10 = vector.load %arg3[%c0_5, %c0_6] : memref<8x128xf32, #tpu.memory_space<vmem>>, vector<8x128xf32>
    tpu.vector_store %arg3[%c0_5, %c0_6], %9#2 {strides = array<i32>} : memref<8x128xf32, #tpu.memory_space<vmem>>, vector<8x128xf32>,
    return
  }
  func.func @transform_0(%arg0: i32) -> (i32, i32) {
    %c0_i32 = arith.constant 0 : i32
    %c0_i32_0 = arith.constant 0 : i32
    return %arg0, %c0_i32 : i32, i32
  }
  func.func @transform_1(%arg0: i32) -> (i32, i32) {
    %c0_i32 = arith.constant 0 : i32
    %c0_i32_0 = arith.constant 0 : i32
    %c0_i32_1 = arith.constant 0 : i32
    return %c0_i32, %c0_i32_0 : i32, i32
  }
  func.func @transform_2(%arg0: i32) -> (i32, i32) {
    %c0_i32 = arith.constant 0 : i32
    %c0_i32_0 = arith.constant 0 : i32
    return %arg0, %c0_i32 : i32, i32
  }
}

</mosaic_0001>

<llo_original>
// kernel: tpu_custom_call.1
$region0: #{tpu_custom_call.1}
  #allocation0 [shape = 'u32[]', space=smem, size = 0x4, offset = 0x4, fixed_abs, tag = 'smem constant byte address 0x4 - core index']
  #allocation1 [shape = 'u32[72,128]{1,0:T(1,128)}', space=vmem, size = 0x9000, scoped, tag = 'internal scratch']
  %s0 = inlined_call_operand.hbm [shape: f32[8,128], index: 0, kind: input, shape index: {}]
  %s1 = inlined_call_operand.hbm [shape: f32[128,128], index: 1, kind: input, shape index: {}]
  %s2 = inlined_call_operand.hbm [shape: f32[8,128], index: 2, kind: output, shape index: {}]
  %s3 = sld [smem:[#allocation0]]
  $region33: #{tpu_custom_call.1} parent=0
    _
  %s5 = ssub.s32 1, %s3
  %s6 = scalar_select 0, %s5, %s3
  $region1: #{tpu_custom_call.1} parent=0
    #allocation2 [shape = 'u8[4096]{0}', space=vmem, size = 0x1000, scoped, tag = 'input window, operand 0, single buffered']
    #allocation3 [shape = 's32[1]{0}', space=sflag, size = 0x4, scoped, tag = 'scoped memory for tpu_custom_call.1']
    #allocation4 [shape = 's32[1]{0}', space=sflag, size = 0x4, scoped, tag = 'scoped memory for tpu_custom_call.1']
    #allocation5 [shape = 'u8[65536]{0}', space=vmem, size = 0x10000, scoped, tag = 'input window, operand 1, single buffered']
    #allocation6 [shape = 's32[1]{0}', space=sflag, size = 0x4, scoped, tag = 'scoped memory for tpu_custom_call.1']
    #allocation7 [shape = 'u8[4096]{0}', space=vmem, size = 0x1000, scoped, tag = 'output window, operand 0, single buffered']
    %7 = vsyncpa [#allocation3], 0
    %8 = vsyncpa [#allocation6], 0
    %9 = vsyncpa [#allocation4], 0
    // Predicated region
    $region2: #{tpu_custom_call.1} parent=1 // pred_check
      _
    $region3: #{tpu_custom_call.1} parent=1 // pred_check_branch
      %11 = sbr.rel (0) target = $region5
    $region4: #{tpu_custom_call.1} parent=1 // pred_region
      %13 = vsyncadd [#allocation3], 0
      %s15 = sshll.u32 %s0, 4
      %s16 = int_to_ptr.hbm [resolvable:$true] %s15
      %s17 = sshll.u32 [#allocation2], 4
      %s18 = int_to_ptr.vmem [resolvable:$true] %s17
      %20 = dma.hbm_to_vmem [thread:$0]  %s16, 128, %s18, [#allocation3]
    $region5: #{tpu_custom_call.1} parent=1 // pred_fallthru
      _
    // Predicated region
    $region6: #{tpu_custom_call.1} parent=1 // pred_check
      _
    $region7: #{tpu_custom_call.1} parent=1 // pred_check_branch
      %22 = sbr.rel (0) target = $region9
    $region8: #{tpu_custom_call.1} parent=1 // pred_region
      %24 = vsyncadd [#allocation6], 0
      %s25 = sshll.u32 %s1, 4
      %s26 = int_to_ptr.hbm [resolvable:$true] %s25
      %s27 = sshll.u32 [#allocation5], 4
      %s28 = int_to_ptr.vmem [resolvable:$true] %s27
      %33 = dma.hbm_to_vmem [thread:$0]  %s26, 2048, %s28, [#allocation6], 128, 128, 8
    $region9: #{tpu_custom_call.1} parent=1 // pred_fallthru
      _
    // Predicated region
    $region10: #{tpu_custom_call.1} parent=1 // pred_check
      _
    $region11: #{tpu_custom_call.1} parent=1 // pred_check_branch
      %35 = sbr.rel (0) target = $region13
    $region12: #{tpu_custom_call.1} parent=1 // pred_region
      %37 = dma.done [#allocation3], 128
    $region13: #{tpu_custom_call.1} parent=1 // pred_fallthru
      _
    // Predicated region
    $region14: #{tpu_custom_call.1} parent=1 // pred_check
      _
    $region15: #{tpu_custom_call.1} parent=1 // pred_check_branch
      %39 = sbr.rel (0) target = $region17
    $region16: #{tpu_custom_call.1} parent=1 // pred_region
      %41 = dma.done [#allocation6], 2048
    $region17: #{tpu_custom_call.1} parent=1 // pred_fallthru
      _
    %v42 = vld [vmem:[#allocation2] sm:$0xff]
    %v43 = vld [vmem:[#allocation5] sm:$0xff]
    %v44 = vld [vmem:[#allocation5 + $0x8] sm:$0xff]
    %v45 = vld [vmem:[#allocation5 + $0x10] sm:$0xff]
    %v46 = vld [vmem:[#allocation5 + $0x18] sm:$0xff]
    %v47 = vld [vmem:[#allocation5 + $0x20] sm:$0xff]
    %v48 = vld [vmem:[#allocation5 + $0x28] sm:$0xff]
    %v49 = vld [vmem:[#allocation5 + $0x30] sm:$0xff]
    %v50 = vld [vmem:[#allocation5 + $0x38] sm:$0xff]
    %v51 = vld [vmem:[#allocation5 + $0x40] sm:$0xff]
    %v52 = vld [vmem:[#allocation5 + $0x48] sm:$0xff]
    %v53 = vld [vmem:[#allocation5 + $0x50] sm:$0xff]
    %v54 = vld [vmem:[#allocation5 + $0x58] sm:$0xff]
    %v55 = vld [vmem:[#allocation5 + $0x60] sm:$0xff]
    %v56 = vld [vmem:[#allocation5 + $0x68] sm:$0xff]
    %v57 = vld [vmem:[#allocation5 + $0x70] sm:$0xff]
    %v58 = vld [vmem:[#allocation5 + $0x78] sm:$0xff]
    %v59 = vtanh.pop %v42
    %v60 = vmul.f32 %v59, %v59
    %61 = vadd.xlane.f32.xlu0 %v60
    %v62 = vpop.xlane.xlu0 %61
    %v63 = vrot.slane %v62, 4
    %v64 = vadd.f32 %v62, %v63
    %v65 = vrot.slane %v64, 2
    %v66 = vadd.f32 %v64, %v65
    %v67 = vrot.slane %v66, 1
    %v68 = vadd.f32 %v66, %v67
    %s69 = vtos %v68
    // While loop
    $region18: #{tpu_custom_call.1} parent=1 // loop_pre_header
      _
    $region19: #{tpu_custom_call.1} parent=1 // loop_header
      %s71 = sphi 0, %s102
      %s72 = sphi %s69, %s112
      %v73 = vphi %v59, %v100
      %p74 = scmp.lt.s32.totalorder %s71, 49
      %p75 = scmp.ge.f32.partialorder %s72, 9.999999e-09
      %p76 = pnand %p74, %p75
      %p77 = pneg %p76
    $region20: #{tpu_custom_call.1} parent=1 // loop_header_branch
      %79 = sbr.rel (%p76) target = $region24
    $region21: #{tpu_custom_call.1} parent=1 // loop_body
      %80 = vmatpush.msra.mxu0 %v58
      %81 = vmatpush.msra.mxu0 %v57
      %82 = vmatpush.msra.mxu0 %v56
      %83 = vmatpush.msra.mxu0 %v55
      %84 = vmatpush.msra.mxu0 %v54
      %85 = vmatpush.msra.mxu0 %v53
      %86 = vmatpush.msra.mxu0 %v52
      %87 = vmatpush.msra.mxu0 %v51
      %88 = vmatpush.msra.mxu0 %v50
      %89 = vmatpush.msra.mxu0 %v49
      %90 = vmatpush.msra.mxu0 %v48
      %91 = vmatpush.msra.mxu0 %v47
      %92 = vmatpush.msra.mxu0 %v46
      %93 = vmatpush.msra.mxu0 %v45
      %94 = vmatpush.msra.mxu0 %v44
      %95 = vmatpush.msra.mxu0 %v43
      %96 = vmatmul.f32.gmra.mxu0 %v73
      %v97 = vpop.f32.mrf.mxu0
      %v98 = vadd.f32 %v42, %v97
      %99 = vdwg.mxu0
      %v100 = vtanh.pop %v98
      %v101 = vsub.f32 %v100, %v73
      %s102 = sadd.s32 %s71, 1
      %v103 = vmul.f32 %v101, %v101
      %104 = vadd.xlane.f32.xlu0 %v103
      %v105 = vpop.xlane.xlu0 %104
      %v106 = vrot.slane %v105, 4
      %v107 = vadd.f32 %v105, %v106
      %v108 = vrot.slane %v107, 2
      %v109 = vadd.f32 %v107, %v108
      %v110 = vrot.slane %v109, 1
      %v111 = vadd.f32 %v109, %v110
      %s112 = vtos %v111
    $region22: #{tpu_custom_call.1} parent=1 // loop_footer
      _
    $region23: #{tpu_custom_call.1} parent=1 // loop_footer_branch
      %70 = sbr.rel target = $region19
    $region24: #{tpu_custom_call.1} parent=1 // loop_exit
      _
    %113 = vst [vmem:[#allocation7] sm:$0xff] %v73
    // Predicated region
    $region25: #{tpu_custom_call.1} parent=1 // pred_check
      _
    $region26: #{tpu_custom_call.1} parent=1 // pred_check_branch
      %115 = sbr.rel (0) target = $region28
    $region27: #{tpu_custom_call.1} parent=1 // pred_region
      %117 = vsyncadd [#allocation4], 0
      %s119 = sshll.u32 [#allocation7], 4
      %s120 = int_to_ptr.vmem [resolvable:$true] %s119
      %s121 = sshll.u32 %s2, 4
      %s122 = int_to_ptr.hbm [resolvable:$true] %s121
      %124 = dma.vmem_to_hbm [thread:$0]  %s120, 128, %s122, [#allocation4]
    $region28: #{tpu_custom_call.1} parent=1 // pred_fallthru
      _
    // Predicated region
    $region29: #{tpu_custom_call.1} parent=1 // pred_check
      _
    $region30: #{tpu_custom_call.1} parent=1 // pred_check_branch
      %126 = sbr.rel (0) target = $region32
    $region31: #{tpu_custom_call.1} parent=1 // pred_region
      %128 = dma.done [#allocation4], 128
    $region32: #{tpu_custom_call.1} parent=1 // pred_fallthru
      _
    %129 = vsyncpa [#allocation3], 1
    %130 = vsyncpa [#allocation6], 1
    %131 = vsyncpa [#allocation4], 1

// kernel: tpu_custom_call.1
$region0: #{tpu_custom_call.1}
  #allocation0 [shape = 'u32[]', space=smem, size = 0x4, offset = 0x4, fixed_abs, tag = 'smem constant byte address 0x4 - core index']
  #allocation1 [shape = 'u32[72,128]{1,0:T(1,128)}', space=vmem, size = 0x9000, scoped, tag = 'internal scratch']
  %s0 = inlined_call_operand.hbm [shape: f32[8,128], index: 0, kind: input, shape index: {}]
  %s1 = inlined_call_operand.hbm [shape: f32[128,128], index: 1, kind: input, shape index: {}]
  %s2 = inlined_call_operand.hbm [shape: f32[8,128], index: 2, kind: output, shape index: {}]
  %s3 = sld [smem:[#allocation0]]
  $region33: #{tpu_custom_call.1} parent=0
    _
  %s5 = ssub.s32 1, %s3
  %s6 = scalar_select 0, %s5, %s3
  $region1: #{tpu_custom_call.1} parent=0
    #allocation2 [shape = 'u8[4096]{0}', space=vmem, size = 0x1000, scoped, tag = 'input window, operand 0, single buffered']
    #allocation3 [shape = 's32[1]{0}', space=sflag, size = 0x4, scoped, tag = 'scoped memory for tpu_custom_call.1']
    #allocation4 [shape = 's32[1]{0}', space=sflag, size = 0x4, scoped, tag = 'scoped memory for tpu_custom_call.1']
    #allocation5 [shape = 'u8[65536]{0}', space=vmem, size = 0x10000, scoped, tag = 'input window, operand 1, single buffered']
    #allocation6 [shape = 's32[1]{0}', space=sflag, size = 0x4, scoped, tag = 'scoped memory for tpu_custom_call.1']
    #allocation7 [shape = 'u8[4096]{0}', space=vmem, size = 0x1000, scoped, tag = 'output window, operand 0, single buffered']
    %7 = vsyncpa [#allocation3], 0
    %8 = vsyncpa [#allocation6], 0
    %9 = vsyncpa [#allocation4], 0
    // Predicated region
    $region2: #{tpu_custom_call.1} parent=1 // pred_check
      _
    $region3: #{tpu_custom_call.1} parent=1 // pred_check_branch
      %11 = sbr.rel (0) target = $region5
    $region4: #{tpu_custom_call.1} parent=1 // pred_region
      %13 = vsyncadd [#allocation3], 0
      %s15 = sshll.u32 %s0, 4
      %s16 = int_to_ptr.hbm [resolvable:$true] %s15
      %s17 = sshll.u32 [#allocation2], 4
      %s18 = int_to_ptr.vmem [resolvable:$true] %s17
      %20 = dma.hbm_to_vmem [thread:$0]  %s16, 128, %s18, [#allocation3]
    $region5: #{tpu_custom_call.1} parent=1 // pred_fallthru
      _
    // Predicated region
    $region6: #{tpu_custom_call.1} parent=1 // pred_check
      _
    $region7: #{tpu_custom_call.1} parent=1 // pred_check_branch
      %22 = sbr.rel (0) target = $region9
    $region8: #{tpu_custom_call.1} parent=1 // pred_region
      %24 = vsyncadd [#allocation6], 0
      %s25 = sshll.u32 %s1, 4
      %s26 = int_to_ptr.hbm [resolvable:$true] %s25
      %s27 = sshll.u32 [#allocation5], 4
      %s28 = int_to_ptr.vmem [resolvable:$true] %s27
      %33 = dma.hbm_to_vmem [thread:$0]  %s26, 2048, %s28, [#allocation6], 128, 128, 8
    $region9: #{tpu_custom_call.1} parent=1 // pred_fallthru
      _
    // Predicated region
    $region10: #{tpu_custom_call.1} parent=1 // pred_check
      _
    $region11: #{tpu_custom_call.1} parent=1 // pred_check_branch
      %35 = sbr.rel (0) target = $region13
    $region12: #{tpu_custom_call.1} parent=1 // pred_region
      %37 = dma.done [#allocation3], 128
    $region13: #{tpu_custom_call.1} parent=1 // pred_fallthru
      _
    // Predicated region
    $region14: #{tpu_custom_call.1} parent=1 // pred_check
      _
    $region15: #{tpu_custom_call.1} parent=1 // pred_check_branch
      %39 = sbr.rel (0) target = $region17
    $region16: #{tpu_custom_call.1} parent=1 // pred_region
      %41 = dma.done [#allocation6], 2048
    $region17: #{tpu_custom_call.1} parent=1 // pred_fallthru
      _
    %v42 = vld [vmem:[#allocation2] sm:$0xff]
    %v43 = vld [vmem:[#allocation5] sm:$0xff]
    %v44 = vld [vmem:[#allocation5 + $0x8] sm:$0xff]
    %v45 = vld [vmem:[#allocation5 + $0x10] sm:$0xff]
    %v46 = vld [vmem:[#allocation5 + $0x18] sm:$0xff]
    %v47 = vld [vmem:[#allocation5 + $0x20] sm:$0xff]
    %v48 = vld [vmem:[#allocation5 + $0x28] sm:$0xff]
    %v49 = vld [vmem:[#allocation5 + $0x30] sm:$0xff]
    %v50 = vld [vmem:[#allocation5 + $0x38] sm:$0xff]
    %v51 = vld [vmem:[#allocation5 + $0x40] sm:$0xff]
    %v52 = vld [vmem:[#allocation5 + $0x48] sm:$0xff]
    %v53 = vld [vmem:[#allocation5 + $0x50] sm:$0xff]
    %v54 = vld [vmem:[#allocation5 + $0x58] sm:$0xff]
    %v55 = vld [vmem:[#allocation5 + $0x60] sm:$0xff]
    %v56 = vld [vmem:[#allocation5 + $0x68] sm:$0xff]
    %v57 = vld [vmem:[#allocation5 + $0x70] sm:$0xff]
    %v58 = vld [vmem:[#allocation5 + $0x78] sm:$0xff]
    %v59 = vtanh.pop %v42
    %v60 = vmul.f32 %v59, %v59
    %61 = vadd.xlane.f32.xlu0 %v60
    %v62 = vpop.xlane.xlu0 %61
    %v63 = vrot.slane %v62, 4
    %v64 = vadd.f32 %v62, %v63
    %v65 = vrot.slane %v64, 2
    %v66 = vadd.f32 %v64, %v65
    %v67 = vrot.slane %v66, 1
    %v68 = vadd.f32 %v66, %v67
    %s69 = vtos %v68
    // While loop
    $region18: #{tpu_custom_call.1} parent=1 // loop_pre_header
      _
    $region19: #{tpu_custom_call.1} parent=1 // loop_header
      %s71 = sphi 0, %s102
      %s72 = sphi %s69, %s112
      %v73 = vphi %v59, %v100
      %p74 = scmp.lt.s32.totalorder %s71, 49
      %p75 = scmp.ge.f32.partialorder %s72, 9.999999e-09
      %p76 = pnand %p74, %p75
      %p77 = pneg %p76
    $region20: #{tpu_custom_call.1} parent=1 // loop_header_branch
      %79 = sbr.rel (%p76) target = $region24
    $region21: #{tpu_custom_call.1} parent=1 // loop_body
      %80 = vmatpush.msra.mxu0 %v58
      %81 = vmatpush.msra.mxu0 %v57
      %82 = vmatpush.msra.mxu0 %v56
      %83 = vmatpush.msra.mxu0 %v55
      %84 = vmatpush.msra.mxu0 %v54
      %85 = vmatpush.msra.mxu0 %v53
      %86 = vmatpush.msra.mxu0 %v52
      %87 = vmatpush.msra.mxu0 %v51
      %88 = vmatpush.msra.mxu0 %v50
      %89 = vmatpush.msra.mxu0 %v49
      %90 = vmatpush.msra.mxu0 %v48
      %91 = vmatpush.msra.mxu0 %v47
      %92 = vmatpush.msra.mxu0 %v46
      %93 = vmatpush.msra.mxu0 %v45
      %94 = vmatpush.msra.mxu0 %v44
      %95 = vmatpush.msra.mxu0 %v43
      %96 = vmatmul.f32.gmra.mxu0 %v73
      %v97 = vpop.f32.mrf.mxu0
      %v98 = vadd.f32 %v42, %v97
      %99 = vdwg.mxu0
      %v100 = vtanh.pop %v98
      %v101 = vsub.f32 %v100, %v73
      %s102 = sadd.s32 %s71, 1
      %v103 = vmul.f32 %v101, %v101
      %104 = vadd.xlane.f32.xlu0 %v103
      %v105 = vpop.xlane.xlu0 %104
      %v106 = vrot.slane %v105, 4
      %v107 = vadd.f32 %v105, %v106
      %v108 = vrot.slane %v107, 2
      %v109 = vadd.f32 %v107, %v108
      %v110 = vrot.slane %v109, 1
      %v111 = vadd.f32 %v109, %v110
      %s112 = vtos %v111
    $region22: #{tpu_custom_call.1} parent=1 // loop_footer
      _
    $region23: #{tpu_custom_call.1} parent=1 // loop_footer_branch
      %70 = sbr.rel target = $region19
    $region24: #{tpu_custom_call.1} parent=1 // loop_exit
      _
    %113 = vst [vmem:[#allocation7] sm:$0xff] %v73
    // Predicated region
    $region25: #{tpu_custom_call.1} parent=1 // pred_check
      _
    $region26: #{tpu_custom_call.1} parent=1 // pred_check_branch
      %115 = sbr.rel (0) target = $region28
    $region27: #{tpu_custom_call.1} parent=1 // pred_region
      %117 = vsyncadd [#allocation4], 0
      %s119 = sshll.u32 [#allocation7], 4
      %s120 = int_to_ptr.vmem [resolvable:$true] %s119
      %s121 = sshll.u32 %s2, 4
      %s122 = int_to_ptr.hbm [resolvable:$true] %s121
      %124 = dma.vmem_to_hbm [thread:$0]  %s120, 128, %s122, [#allocation4]
    $region28: #{tpu_custom_call.1} parent=1 // pred_fallthru
      _
    // Predicated region
    $region29: #{tpu_custom_call.1} parent=1 // pred_check
      _
    $region30: #{tpu_custom_call.1} parent=1 // pred_check_branch
      %126 = sbr.rel (0) target = $region32
    $region31: #{tpu_custom_call.1} parent=1 // pred_region
      %128 = dma.done [#allocation4], 128
    $region32: #{tpu_custom_call.1} parent=1 // pred_fallthru
      _
    %129 = vsyncpa [#allocation3], 1
    %130 = vsyncpa [#allocation6], 1
    %131 = vsyncpa [#allocation4], 1

</llo_original>
